<compile_context>
chip_gen: v6e
topology: v6e:2x2x1
jax: 0.10.0
libtpu: 0.0.40
codegen_flags: <defaults>
</compile_context>

<pallas_src>
import jax
import jax.numpy as jnp
from jax import lax
from jax.experimental import pallas as pl
from jax.experimental.pallas import tpu as pltpu


def _round_up(x, m):
    return (x + m - 1) // m * m


def _char_decoder_kernel(xproj_ref, whh_ref, wout_ref, bout_ref, h0_ref, c0_ref,
                         scores_ref, hn_ref, cn_ref,
                         hhist_scr):
    """Fused LSTM recurrence + batched output projection for one batch block.

    xproj_ref : (L, Bc, 4H) f32   precomputed x @ W_ih + (b_ih + b_hh), i|f|o|g
    whh_ref   : (H, 4H)           mxu dtype (bf16 default), i|f|o|g columns
    wout_ref  : (H, Vp)           mxu dtype
    bout_ref  : (1, Vp) f32
    h0/c0     : (Bc, H) f32
    scores_ref: (L, Bc, Vp) f32
    hn/cn     : (Bc, H) f32
    hhist_scr : (L*Bc, H) mxu-dtype VMEM scratch (h history)
    """
    L, Bc, _ = xproj_ref.shape
    H = whh_ref.shape[0]
    Vp = wout_ref.shape[1]
    mxu_dt = whh_ref.dtype

    # Hoisted: load the recurrent weight once; step() closes over the value.
    whh = whh_ref[...]

    def step(t, carry):
        h, c = carry
        # Only the hidden->hidden matmul remains on the serial critical path.
        gates = xproj_ref[t] + jnp.dot(h.astype(mxu_dt), whh,
                                       preferred_element_type=jnp.float32)
        # Gate order i|f|o|g: one wide sigmoid over the lane prefix (no lane
        # shuffle ahead of the EUP) and one tanh over the tail.
        sig = jax.nn.sigmoid(gates[:, :3 * H])
        g_g = jnp.tanh(gates[:, 3 * H:])
        i_g = sig[:, 0 * H:1 * H]
        f_g = sig[:, 1 * H:2 * H]
        o_g = sig[:, 2 * H:3 * H]
        c_new = f_g * c + i_g * g_g            # carries stay f32
        h_new = o_g * jnp.tanh(c_new)
        row = pl.multiple_of(t * Bc, Bc)       # sublane-aligned (Bc % 8 == 0)
        hhist_scr[pl.ds(row, Bc), :] = h_new.astype(mxu_dt)
        return (h_new, c_new)

    h_last, c_last = lax.fori_loop(0, L, step, (h0_ref[...], c0_ref[...]),
                                   unroll=min(L, 8))
    hn_ref[...] = h_last
    cn_ref[...] = c_last

    # One lane-dense output projection over every timestep of this batch block.
    proj = jnp.dot(hhist_scr[...], wout_ref[...],
                   preferred_element_type=jnp.float32) + bout_ref[...]
    scores_ref[...] = proj.reshape(L, Bc, Vp)


def char_decoder_forward(char_sequence, embed_table, w_ih, w_hh, b_ih, b_hh,
                         w_out, b_out, dec_hidden=None,
                         mxu_dtype=jnp.bfloat16):
    """Pallas equivalent of CharDecoder.forward.

    char_sequence: (L, B) int32
    returns: scores (L, B, V), (h_n, c_n) each (1, B, H)
    """
    L, B = char_sequence.shape
    H = w_hh.shape[0]
    V = w_out.shape[1]

    # Batch blocking: keep each per-step MXU push well fed (big M) but expose a
    # batch-parallel grid axis (2x on v7x) and cap per-block VMEM at scale.
    if B <= 256:
        Bp = _round_up(max(B, 8), 8)          # sublane minimum
        Bc = Bp
    else:
        Bc = 256
        Bp = _round_up(B, Bc)
    nB = Bp // Bc
    Vp = _round_up(V, 128)                    # lane-dense scores output

    # Reorder gate columns from PyTorch's i|f|g|o to i|f|o|g so the kernel can
    # apply one sigmoid over [0,3H) and one tanh over [3H,4H).
    perm = jnp.concatenate([jnp.arange(0, 2 * H),
                            jnp.arange(3 * H, 4 * H),
                            jnp.arange(2 * H, 3 * H)])
    w_ih_r = w_ih[:, perm]
    w_hh_r = w_hh[:, perm]
    bias_r = (b_ih + b_hh)[perm]

    # Embedding + input projection + both biases folded into one (V, 4H) table,
    # gathered per character (glue outside the kernel).  padding_idx row of
    # embed_table is zero, so pad chars map to the bias row -- same math as
    # doing the projection per step.
    # TODO(synk): at training scale, move this gather in-kernel (scalar-prefetch
    # char ids + VMEM-resident (V,4H) table) to cut the dominant HBM input read.
    x_proj_table = embed_table.astype(jnp.float32) @ w_ih_r + bias_r
    x_proj = x_proj_table[char_sequence]                      # (L, B, 4H)
    if Bp != B:
        x_proj = jnp.pad(x_proj, ((0, 0), (0, Bp - B), (0, 0)))

    if dec_hidden is None:
        h0 = jnp.zeros((Bp, H), jnp.float32)
        c0 = jnp.zeros((Bp, H), jnp.float32)
    else:
        h0 = dec_hidden[0].reshape(B, H).astype(jnp.float32)
        c0 = dec_hidden[1].reshape(B, H).astype(jnp.float32)
        if Bp != B:
            h0 = jnp.pad(h0, ((0, Bp - B), (0, 0)))
            c0 = jnp.pad(c0, ((0, Bp - B), (0, 0)))

    w_hh_k = w_hh_r.astype(mxu_dtype)
    w_out_k = jnp.pad(w_out, ((0, 0), (0, Vp - V))).astype(mxu_dtype)
    b_out_k = jnp.pad(b_out, (0, Vp - V)).reshape(1, Vp).astype(jnp.float32)

    scores_p, h_n, c_n = pl.pallas_call(
        _char_decoder_kernel,
        grid=(nB,),
        in_specs=[
            pl.BlockSpec((L, Bc, 4 * H), lambda b: (0, b, 0)),   # x_proj
            pl.BlockSpec((H, 4 * H), lambda b: (0, 0)),          # W_hh
            pl.BlockSpec((H, Vp), lambda b: (0, 0)),             # W_out
            pl.BlockSpec((1, Vp), lambda b: (0, 0)),             # b_out
            pl.BlockSpec((Bc, H), lambda b: (b, 0)),             # h0
            pl.BlockSpec((Bc, H), lambda b: (b, 0)),             # c0
        ],
        out_specs=(
            pl.BlockSpec((L, Bc, Vp), lambda b: (0, b, 0)),      # scores
            pl.BlockSpec((Bc, H), lambda b: (b, 0)),             # h_n
            pl.BlockSpec((Bc, H), lambda b: (b, 0)),             # c_n
        ),
        out_shape=(
            jax.ShapeDtypeStruct((L, Bp, Vp), jnp.float32),
            jax.ShapeDtypeStruct((Bp, H), jnp.float32),
            jax.ShapeDtypeStruct((Bp, H), jnp.float32),
        ),
        scratch_shapes=[pltpu.VMEM((L * Bc, H), mxu_dtype)],     # h history
        compiler_params=pltpu.CompilerParams(
            dimension_semantics=("parallel",)),
    )(x_proj, w_hh_k, w_out_k, b_out_k, h0, c0)

    scores = scores_p[:, :B, :V]
    return scores, (h_n[:B].reshape(1, B, H), c_n[:B].reshape(1, B, H))


def char_decoder_ref(char_sequence, embed_table, w_ih, w_hh, b_ih, b_hh,
                     w_out, b_out, dec_hidden=None):
    """Pure-JAX reference (matches PyTorch LSTM gate math, i|f|g|o order)."""
    L, B = char_sequence.shape
    H = w_hh.shape[0]
    x_embed = embed_table[char_sequence]
    if dec_hidden is None:
        h0 = jnp.zeros((B, H), jnp.float32)
        c0 = jnp.zeros((B, H), jnp.float32)
    else:
        h0 = dec_hidden[0].reshape(B, H)
        c0 = dec_hidden[1].reshape(B, H)
    b = b_ih + b_hh

    def step(carry, x_t):
        h, c = carry
        gates = x_t @ w_ih + h @ w_hh + b
        i, f, g, o = jnp.split(gates, 4, axis=-1)
        i = jax.nn.sigmoid(i)
        f = jax.nn.sigmoid(f)
        g = jnp.tanh(g)
        o = jax.nn.sigmoid(o)
        c = f * c + i * g
        h = o * jnp.tanh(c)
        s = h @ w_out + b_out
        return (h, c), s

    (h_n, c_n), scores = jax.lax.scan(step, (h0, c0), x_embed)
    return scores, (h_n[None], c_n[None])


if __name__ == "__main__":
    # Small, deterministic configuration consistent with CharDecoder.__init__
    L, B = 8, 4                 # (length, batch) char_sequence
    E = 50                      # char_embedding_size (default)
    H = 32                      # hidden_size
    V = 30                      # len(target_vocab.char2id)
    PAD = 0                     # target_vocab.char2id['<pad>']

    key = jax.random.PRNGKey(0)
    keys = jax.random.split(key, 10)

    embed_table = 0.1 * jax.random.normal(keys[0], (V, E), jnp.float32)
    embed_table = embed_table.at[PAD].set(0.0)   # padding_idx row is zero

    w_ih = 0.1 * jax.random.normal(keys[1], (E, 4 * H), jnp.float32)   # (in, 4H)
    w_hh = 0.1 * jax.random.normal(keys[2], (H, 4 * H), jnp.float32)
    b_ih = 0.1 * jax.random.normal(keys[3], (4 * H,), jnp.float32)
    b_hh = 0.1 * jax.random.normal(keys[4], (4 * H,), jnp.float32)
    w_out = 0.1 * jax.random.normal(keys[5], (H, V), jnp.float32)      # (H, vocab)
    b_out = 0.1 * jax.random.normal(keys[6], (V,), jnp.float32)

    char_sequence = jax.random.randint(keys[7], (L, B), 0, V, jnp.int32)
    h0 = 0.5 * jax.random.normal(keys[8], (1, B, H), jnp.float32)
    c0 = 0.5 * jax.random.normal(keys[9], (1, B, H), jnp.float32)
    dec_hidden = (h0, c0)

    # Pure-JAX reference
    scores_r, (h_r, c_r) = char_decoder_ref(
        char_sequence, embed_table, w_ih, w_hh, b_ih, b_hh, w_out, b_out, dec_hidden)

    # Default path: bf16 MXU operands (recommended on all generations);
    # gate math + carries stay f32.
    scores_b, (h_b, c_b) = char_decoder_forward(
        char_sequence, embed_table, w_ih, w_hh, b_ih, b_hh, w_out, b_out, dec_hidden)
    jax.block_until_ready((scores_b, h_b, c_b))
    assert scores_b.shape == (L, B, V)
    assert h_b.shape == (1, B, H) and c_b.shape == (1, B, H)
    assert jnp.allclose(scores_b, scores_r, atol=5e-2, rtol=5e-2)
    assert jnp.allclose(h_b, h_r, atol=5e-2, rtol=5e-2)
    assert jnp.allclose(c_b, c_r, atol=5e-2, rtol=5e-2)

    # f32 MXU path: tight tolerance against the reference.
    scores_f, (h_f, c_f) = char_decoder_forward(
        char_sequence, embed_table, w_ih, w_hh, b_ih, b_hh, w_out, b_out,
        dec_hidden, mxu_dtype=jnp.float32)
    jax.block_until_ready((scores_f, h_f, c_f))
    assert jnp.allclose(scores_f, scores_r, atol=3e-5, rtol=1e-4)
    assert jnp.allclose(h_f, h_r, atol=3e-5, rtol=1e-4)
    assert jnp.allclose(c_f, c_r, atol=3e-5, rtol=1e-4)

    # TODO(synk): train_forward (masked cross-entropy sum) and decode_greedy
    # (python-loop string assembly) are host-side glue around this forward
    # kernel; not kernelized.
    print("KERNEL_OK")
</pallas_src>

<mosaic_0001>
module attributes {stable_mosaic.version = 11 : i64} {
  func.func @_char_decoder_kernel(%arg0: i32, %arg1: memref<8x8x128xf32, #tpu.memory_space<vmem>>, %arg2: memref<32x128xbf16, #tpu.memory_space<vmem>>, %arg3: memref<32x128xbf16, #tpu.memory_space<vmem>>, %arg4: memref<1x128xf32, #tpu.memory_space<vmem>>, %arg5: memref<8x32xf32, #tpu.memory_space<vmem>>, %arg6: memref<8x32xf32, #tpu.memory_space<vmem>>, %arg7: memref<8x8x128xf32, #tpu.memory_space<vmem>>, %arg8: memref<8x32xf32, #tpu.memory_space<vmem>>, %arg9: memref<8x32xf32, #tpu.memory_space<vmem>>, %arg10: memref<64x32xbf16, #tpu.memory_space<vmem>>) attributes {dimension_semantics = [#tpu.dimension_semantics<parallel>], iteration_bounds = array<i64: 1>, scalar_prefetch = 0 : i64, scratch_operands = 1 : i64, tpu.core_type = #tpu.core_type<tc>, window_params = [{transform_indices = @transform_0, window_bounds = array<i64: 8, 8, 128>}, {pipeline_mode = #tpu.pipeline_mode<synchronous>, transform_indices = @transform_1, window_bounds = array<i64: 32, 128>}, {pipeline_mode = #tpu.pipeline_mode<synchronous>, transform_indices = @transform_2, window_bounds = array<i64: 32, 128>}, {pipeline_mode = #tpu.pipeline_mode<synchronous>, transform_indices = @transform_3, window_bounds = array<i64: 1, 128>}, {transform_indices = @transform_4, window_bounds = array<i64: 8, 32>}, {transform_indices = @transform_5, window_bounds = array<i64: 8, 32>}, {transform_indices = @transform_6, window_bounds = array<i64: 8, 8, 128>}, {transform_indices = @transform_7, window_bounds = array<i64: 8, 32>}, {transform_indices = @transform_8, window_bounds = array<i64: 8, 32>}]} {
    %c0 = arith.constant 0 : index
    %c0_0 = arith.constant 0 : index
    %0 = vector.load %arg2[%c0, %c0_0] : memref<32x128xbf16, #tpu.memory_space<vmem>>, vector<32x128xbf16>
    %c0_1 = arith.constant 0 : index
    %c0_2 = arith.constant 0 : index
    %1 = vector.load %arg5[%c0_1, %c0_2] : memref<8x32xf32, #tpu.memory_space<vmem>>, vector<8x32xf32>
    %c0_3 = arith.constant 0 : index
    %c0_4 = arith.constant 0 : index
    %2 = vector.load %arg6[%c0_3, %c0_4] : memref<8x32xf32, #tpu.memory_space<vmem>>, vector<8x32xf32>
    %c0_i32 = arith.constant 0 : i32
    %3 = arith.index_cast %c0_i32 : i32 to index
    %c0_5 = arith.constant 0 : index
    %c0_6 = arith.constant 0 : index
    %4 = vector.load %arg1[%3, %c0_5, %c0_6] : memref<8x8x128xf32, #tpu.memory_space<vmem>>, vector<1x8x128xf32>
    %5 = vector.shape_cast %4 : vector<1x8x128xf32> to vector<8x128xf32>
    %6 = arith.truncf %1 : vector<8x32xf32> to vector<8x32xbf16>
    %cst = arith.constant dense<0.000000e+00> : vector<8x128xf32>
    %7 = tpu.matmul %6, %0, %cst {dimension_numbers = #tpu.dot_dimension_numbers<[1], [0], [0], [1], [0, 0, 1, 1], [], []>} : vector<8x32xbf16>, vector<32x128xbf16>, vector<8x128xf32> -> vector<8x128xf32>
    %8 = arith.addf %5, %7 : vector<8x128xf32>
    %9 = vector.extract_strided_slice %8 {offsets = [0, 0], sizes = [8, 96], strides = [1, 1]} : vector<8x128xf32> to vector<8x96xf32>
    %10 = arith.negf %9 : vector<8x96xf32>
    %11 = math.exp %10 : vector<8x96xf32>
    %cst_7 = arith.constant 1.000000e+00 : f32
    %12 = vector.broadcast %cst_7 : f32 to vector<8x96xf32>
    %13 = arith.addf %12, %11 : vector<8x96xf32>
    %14 = arith.divf %12, %13 : vector<8x96xf32>
    %15 = vector.extract_strided_slice %8 {offsets = [0, 96], sizes = [8, 32], strides = [1, 1]} : vector<8x128xf32> to vector<8x32xf32>
    %16 = math.tanh %15 : vector<8x32xf32>
    %17 = vector.extract_strided_slice %14 {offsets = [0, 0], sizes = [8, 32], strides = [1, 1]} : vector<8x96xf32> to vector<8x32xf32>
    %18 = vector.extract_strided_slice %14 {offsets = [0, 32], sizes = [8, 32], strides = [1, 1]} : vector<8x96xf32> to vector<8x32xf32>
    %19 = vector.extract_strided_slice %14 {offsets = [0, 64], sizes = [8, 32], strides = [1, 1]} : vector<8x96xf32> to vector<8x32xf32>
    %20 = arith.mulf %18, %2 : vector<8x32xf32>
    %21 = arith.mulf %17, %16 : vector<8x32xf32>
    %22 = arith.addf %20, %21 : vector<8x32xf32>
    %23 = math.tanh %22 : vector<8x32xf32>
    %24 = arith.mulf %19, %23 : vector<8x32xf32>
    %c8_i32 = arith.constant 8 : i32
    %25 = arith.muli %c0_i32, %c8_i32 : i32
    %26 = tpu.assume_multiple %25, 8 : i32
    %27 = arith.truncf %24 : vector<8x32xf32> to vector<8x32xbf16>
    %28 = arith.index_cast %26 : i32 to index
    %c0_8 = arith.constant 0 : index
    %29 = vector.load %arg10[%28, %c0_8] : memref<64x32xbf16, #tpu.memory_space<vmem>>, vector<8x32xbf16>
    tpu.vector_store %arg10[%28, %c0_8], %27 {strides = array<i32>} : memref<64x32xbf16, #tpu.memory_space<vmem>>, vector<8x32xbf16>,
    %c1_i32 = arith.constant 1 : i32
    %30 = arith.index_cast %c1_i32 : i32 to index
    %c0_9 = arith.constant 0 : index
    %c0_10 = arith.constant 0 : index
    %31 = vector.load %arg1[%30, %c0_9, %c0_10] : memref<8x8x128xf32, #tpu.memory_space<vmem>>, vector<1x8x128xf32>
    %32 = vector.shape_cast %31 : vector<1x8x128xf32> to vector<8x128xf32>
    %33 = arith.truncf %24 : vector<8x32xf32> to vector<8x32xbf16>
    %cst_11 = arith.constant dense<0.000000e+00> : vector<8x128xf32>
    %34 = tpu.matmul %33, %0, %cst_11 {dimension_numbers = #tpu.dot_dimension_numbers<[1], [0], [0], [1], [0, 0, 1, 1], [], []>} : vector<8x32xbf16>, vector<32x128xbf16>, vector<8x128xf32> -> vector<8x128xf32>
    %35 = arith.addf %32, %34 : vector<8x128xf32>
    %36 = vector.extract_strided_slice %35 {offsets = [0, 0], sizes = [8, 96], strides = [1, 1]} : vector<8x128xf32> to vector<8x96xf32>
    %37 = arith.negf %36 : vector<8x96xf32>
    %38 = math.exp %37 : vector<8x96xf32>
    %cst_12 = arith.constant 1.000000e+00 : f32
    %39 = vector.broadcast %cst_12 : f32 to vector<8x96xf32>
    %40 = arith.addf %39, %38 : vector<8x96xf32>
    %41 = arith.divf %39, %40 : vector<8x96xf32>
    %42 = vector.extract_strided_slice %35 {offsets = [0, 96], sizes = [8, 32], strides = [1, 1]} : vector<8x128xf32> to vector<8x32xf32>
    %43 = math.tanh %42 : vector<8x32xf32>
    %44 = vector.extract_strided_slice %41 {offsets = [0, 0], sizes = [8, 32], strides = [1, 1]} : vector<8x96xf32> to vector<8x32xf32>
    %45 = vector.extract_strided_slice %41 {offsets = [0, 32], sizes = [8, 32], strides = [1, 1]} : vector<8x96xf32> to vector<8x32xf32>
    %46 = vector.extract_strided_slice %41 {offsets = [0, 64], sizes = [8, 32], strides = [1, 1]} : vector<8x96xf32> to vector<8x32xf32>
    %47 = arith.mulf %45, %22 : vector<8x32xf32>
    %48 = arith.mulf %44, %43 : vector<8x32xf32>
    %49 = arith.addf %47, %48 : vector<8x32xf32>
    %50 = math.tanh %49 : vector<8x32xf32>
    %51 = arith.mulf %46, %50 : vector<8x32xf32>
    %c8_i32_13 = arith.constant 8 : i32
    %52 = arith.muli %c1_i32, %c8_i32_13 : i32
    %53 = tpu.assume_multiple %52, 8 : i32
    %54 = arith.truncf %51 : vector<8x32xf32> to vector<8x32xbf16>
    %55 = arith.index_cast %53 : i32 to index
    %c0_14 = arith.constant 0 : index
    %56 = vector.load %arg10[%55, %c0_14] : memref<64x32xbf16, #tpu.memory_space<vmem>>, vector<8x32xbf16>
    tpu.vector_store %arg10[%55, %c0_14], %54 {strides = array<i32>} : memref<64x32xbf16, #tpu.memory_space<vmem>>, vector<8x32xbf16>,
    %c2_i32 = arith.constant 2 : i32
    %57 = arith.index_cast %c2_i32 : i32 to index
    %c0_15 = arith.constant 0 : index
    %c0_16 = arith.constant 0 : index
    %58 = vector.load %arg1[%57, %c0_15, %c0_16] : memref<8x8x128xf32, #tpu.memory_space<vmem>>, vector<1x8x128xf32>
    %59 = vector.shape_cast %58 : vector<1x8x128xf32> to vector<8x128xf32>
    %60 = arith.truncf %51 : vector<8x32xf32> to vector<8x32xbf16>
    %cst_17 = arith.constant dense<0.000000e+00> : vector<8x128xf32>
    %61 = tpu.matmul %60, %0, %cst_17 {dimension_numbers = #tpu.dot_dimension_numbers<[1], [0], [0], [1], [0, 0, 1, 1], [], []>} : vector<8x32xbf16>, vector<32x128xbf16>, vector<8x128xf32> -> vector<8x128xf32>
    %62 = arith.addf %59, %61 : vector<8x128xf32>
    %63 = vector.extract_strided_slice %62 {offsets = [0, 0], sizes = [8, 96], strides = [1, 1]} : vector<8x128xf32> to vector<8x96xf32>
    %64 = arith.negf %63 : vector<8x96xf32>
    %65 = math.exp %64 : vector<8x96xf32>
    %cst_18 = arith.constant 1.000000e+00 : f32
    %66 = vector.broadcast %cst_18 : f32 to vector<8x96xf32>
    %67 = arith.addf %66, %65 : vector<8x96xf32>
    %68 = arith.divf %66, %67 : vector<8x96xf32>
    %69 = vector.extract_strided_slice %62 {offsets = [0, 96], sizes = [8, 32], strides = [1, 1]} : vector<8x128xf32> to vector<8x32xf32>
    %70 = math.tanh %69 : vector<8x32xf32>
    %71 = vector.extract_strided_slice %68 {offsets = [0, 0], sizes = [8, 32], strides = [1, 1]} : vector<8x96xf32> to vector<8x32xf32>
    %72 = vector.extract_strided_slice %68 {offsets = [0, 32], sizes = [8, 32], strides = [1, 1]} : vector<8x96xf32> to vector<8x32xf32>
    %73 = vector.extract_strided_slice %68 {offsets = [0, 64], sizes = [8, 32], strides = [1, 1]} : vector<8x96xf32> to vector<8x32xf32>
    %74 = arith.mulf %72, %49 : vector<8x32xf32>
    %75 = arith.mulf %71, %70 : vector<8x32xf32>
    %76 = arith.addf %74, %75 : vector<8x32xf32>
    %77 = math.tanh %76 : vector<8x32xf32>
    %78 = arith.mulf %73, %77 : vector<8x32xf32>
    %c8_i32_19 = arith.constant 8 : i32
    %79 = arith.muli %c2_i32, %c8_i32_19 : i32
    %80 = tpu.assume_multiple %79, 8 : i32
    %81 = arith.truncf %78 : vector<8x32xf32> to vector<8x32xbf16>
    %82 = arith.index_cast %80 : i32 to index
    %c0_20 = arith.constant 0 : index
    %83 = vector.load %arg10[%82, %c0_20] : memref<64x32xbf16, #tpu.memory_space<vmem>>, vector<8x32xbf16>
    tpu.vector_store %arg10[%82, %c0_20], %81 {strides = array<i32>} : memref<64x32xbf16, #tpu.memory_space<vmem>>, vector<8x32xbf16>,
    %c3_i32 = arith.constant 3 : i32
    %84 = arith.index_cast %c3_i32 : i32 to index
    %c0_21 = arith.constant 0 : index
    %c0_22 = arith.constant 0 : index
    %85 = vector.load %arg1[%84, %c0_21, %c0_22] : memref<8x8x128xf32, #tpu.memory_space<vmem>>, vector<1x8x128xf32>
    %86 = vector.shape_cast %85 : vector<1x8x128xf32> to vector<8x128xf32>
    %87 = arith.truncf %78 : vector<8x32xf32> to vector<8x32xbf16>
    %cst_23 = arith.constant dense<0.000000e+00> : vector<8x128xf32>
    %88 = tpu.matmul %87, %0, %cst_23 {dimension_numbers = #tpu.dot_dimension_numbers<[1], [0], [0], [1], [0, 0, 1, 1], [], []>} : vector<8x32xbf16>, vector<32x128xbf16>, vector<8x128xf32> -> vector<8x128xf32>
    %89 = arith.addf %86, %88 : vector<8x128xf32>
    %90 = vector.extract_strided_slice %89 {offsets = [0, 0], sizes = [8, 96], strides = [1, 1]} : vector<8x128xf32> to vector<8x96xf32>
    %91 = arith.negf %90 : vector<8x96xf32>
    %92 = math.exp %91 : vector<8x96xf32>
    %cst_24 = arith.constant 1.000000e+00 : f32
    %93 = vector.broadcast %cst_24 : f32 to vector<8x96xf32>
    %94 = arith.addf %93, %92 : vector<8x96xf32>
    %95 = arith.divf %93, %94 : vector<8x96xf32>
    %96 = vector.extract_strided_slice %89 {offsets = [0, 96], sizes = [8, 32], strides = [1, 1]} : vector<8x128xf32> to vector<8x32xf32>
    %97 = math.tanh %96 : vector<8x32xf32>
    %98 = vector.extract_strided_slice %95 {offsets = [0, 0], sizes = [8, 32], strides = [1, 1]} : vector<8x96xf32> to vector<8x32xf32>
    %99 = vector.extract_strided_slice %95 {offsets = [0, 32], sizes = [8, 32], strides = [1, 1]} : vector<8x96xf32> to vector<8x32xf32>
    %100 = vector.extract_strided_slice %95 {offsets = [0, 64], sizes = [8, 32], strides = [1, 1]} : vector<8x96xf32> to vector<8x32xf32>
    %101 = arith.mulf %99, %76 : vector<8x32xf32>
    %102 = arith.mulf %98, %97 : vector<8x32xf32>
    %103 = arith.addf %101, %102 : vector<8x32xf32>
    %104 = math.tanh %103 : vector<8x32xf32>
    %105 = arith.mulf %100, %104 : vector<8x32xf32>
    %c8_i32_25 = arith.constant 8 : i32
    %106 = arith.muli %c3_i32, %c8_i32_25 : i32
    %107 = tpu.assume_multiple %106, 8 : i32
    %108 = arith.truncf %105 : vector<8x32xf32> to vector<8x32xbf16>
    %109 = arith.index_cast %107 : i32 to index
    %c0_26 = arith.constant 0 : index
    %110 = vector.load %arg10[%109, %c0_26] : memref<64x32xbf16, #tpu.memory_space<vmem>>, vector<8x32xbf16>
    tpu.vector_store %arg10[%109, %c0_26], %108 {strides = array<i32>} : memref<64x32xbf16, #tpu.memory_space<vmem>>, vector<8x32xbf16>,
    %c4_i32 = arith.constant 4 : i32
    %111 = arith.index_cast %c4_i32 : i32 to index
    %c0_27 = arith.constant 0 : index
    %c0_28 = arith.constant 0 : index
    %112 = vector.load %arg1[%111, %c0_27, %c0_28] : memref<8x8x128xf32, #tpu.memory_space<vmem>>, vector<1x8x128xf32>
    %113 = vector.shape_cast %112 : vector<1x8x128xf32> to vector<8x128xf32>
    %114 = arith.truncf %105 : vector<8x32xf32> to vector<8x32xbf16>
    %cst_29 = arith.constant dense<0.000000e+00> : vector<8x128xf32>
    %115 = tpu.matmul %114, %0, %cst_29 {dimension_numbers = #tpu.dot_dimension_numbers<[1], [0], [0], [1], [0, 0, 1, 1], [], []>} : vector<8x32xbf16>, vector<32x128xbf16>, vector<8x128xf32> -> vector<8x128xf32>
    %116 = arith.addf %113, %115 : vector<8x128xf32>
    %117 = vector.extract_strided_slice %116 {offsets = [0, 0], sizes = [8, 96], strides = [1, 1]} : vector<8x128xf32> to vector<8x96xf32>
    %118 = arith.negf %117 : vector<8x96xf32>
    %119 = math.exp %118 : vector<8x96xf32>
    %cst_30 = arith.constant 1.000000e+00 : f32
    %120 = vector.broadcast %cst_30 : f32 to vector<8x96xf32>
    %121 = arith.addf %120, %119 : vector<8x96xf32>
    %122 = arith.divf %120, %121 : vector<8x96xf32>
    %123 = vector.extract_strided_slice %116 {offsets = [0, 96], sizes = [8, 32], strides = [1, 1]} : vector<8x128xf32> to vector<8x32xf32>
    %124 = math.tanh %123 : vector<8x32xf32>
    %125 = vector.extract_strided_slice %122 {offsets = [0, 0], sizes = [8, 32], strides = [1, 1]} : vector<8x96xf32> to vector<8x32xf32>
    %126 = vector.extract_strided_slice %122 {offsets = [0, 32], sizes = [8, 32], strides = [1, 1]} : vector<8x96xf32> to vector<8x32xf32>
    %127 = vector.extract_strided_slice %122 {offsets = [0, 64], sizes = [8, 32], strides = [1, 1]} : vector<8x96xf32> to vector<8x32xf32>
    %128 = arith.mulf %126, %103 : vector<8x32xf32>
    %129 = arith.mulf %125, %124 : vector<8x32xf32>
    %130 = arith.addf %128, %129 : vector<8x32xf32>
    %131 = math.tanh %130 : vector<8x32xf32>
    %132 = arith.mulf %127, %131 : vector<8x32xf32>
    %c8_i32_31 = arith.constant 8 : i32
    %133 = arith.muli %c4_i32, %c8_i32_31 : i32
    %134 = tpu.assume_multiple %133, 8 : i32
    %135 = arith.truncf %132 : vector<8x32xf32> to vector<8x32xbf16>
    %136 = arith.index_cast %134 : i32 to index
    %c0_32 = arith.constant 0 : index
    %137 = vector.load %arg10[%136, %c0_32] : memref<64x32xbf16, #tpu.memory_space<vmem>>, vector<8x32xbf16>
    tpu.vector_store %arg10[%136, %c0_32], %135 {strides = array<i32>} : memref<64x32xbf16, #tpu.memory_space<vmem>>, vector<8x32xbf16>,
    %c5_i32 = arith.constant 5 : i32
    %138 = arith.index_cast %c5_i32 : i32 to index
    %c0_33 = arith.constant 0 : index
    %c0_34 = arith.constant 0 : index
    %139 = vector.load %arg1[%138, %c0_33, %c0_34] : memref<8x8x128xf32, #tpu.memory_space<vmem>>, vector<1x8x128xf32>
    %140 = vector.shape_cast %139 : vector<1x8x128xf32> to vector<8x128xf32>
    %141 = arith.truncf %132 : vector<8x32xf32> to vector<8x32xbf16>
    %cst_35 = arith.constant dense<0.000000e+00> : vector<8x128xf32>
    %142 = tpu.matmul %141, %0, %cst_35 {dimension_numbers = #tpu.dot_dimension_numbers<[1], [0], [0], [1], [0, 0, 1, 1], [], []>} : vector<8x32xbf16>, vector<32x128xbf16>, vector<8x128xf32> -> vector<8x128xf32>
    %143 = arith.addf %140, %142 : vector<8x128xf32>
    %144 = vector.extract_strided_slice %143 {offsets = [0, 0], sizes = [8, 96], strides = [1, 1]} : vector<8x128xf32> to vector<8x96xf32>
    %145 = arith.negf %144 : vector<8x96xf32>
    %146 = math.exp %145 : vector<8x96xf32>
    %cst_36 = arith.constant 1.000000e+00 : f32
    %147 = vector.broadcast %cst_36 : f32 to vector<8x96xf32>
    %148 = arith.addf %147, %146 : vector<8x96xf32>
    %149 = arith.divf %147, %148 : vector<8x96xf32>
    %150 = vector.extract_strided_slice %143 {offsets = [0, 96], sizes = [8, 32], strides = [1, 1]} : vector<8x128xf32> to vector<8x32xf32>
    %151 = math.tanh %150 : vector<8x32xf32>
    %152 = vector.extract_strided_slice %149 {offsets = [0, 0], sizes = [8, 32], strides = [1, 1]} : vector<8x96xf32> to vector<8x32xf32>
    %153 = vector.extract_strided_slice %149 {offsets = [0, 32], sizes = [8, 32], strides = [1, 1]} : vector<8x96xf32> to vector<8x32xf32>
    %154 = vector.extract_strided_slice %149 {offsets = [0, 64], sizes = [8, 32], strides = [1, 1]} : vector<8x96xf32> to vector<8x32xf32>
    %155 = arith.mulf %153, %130 : vector<8x32xf32>
    %156 = arith.mulf %152, %151 : vector<8x32xf32>
    %157 = arith.addf %155, %156 : vector<8x32xf32>
    %158 = math.tanh %157 : vector<8x32xf32>
    %159 = arith.mulf %154, %158 : vector<8x32xf32>
    %c8_i32_37 = arith.constant 8 : i32
    %160 = arith.muli %c5_i32, %c8_i32_37 : i32
    %161 = tpu.assume_multiple %160, 8 : i32
    %162 = arith.truncf %159 : vector<8x32xf32> to vector<8x32xbf16>
    %163 = arith.index_cast %161 : i32 to index
    %c0_38 = arith.constant 0 : index
    %164 = vector.load %arg10[%163, %c0_38] : memref<64x32xbf16, #tpu.memory_space<vmem>>, vector<8x32xbf16>
    tpu.vector_store %arg10[%163, %c0_38], %162 {strides = array<i32>} : memref<64x32xbf16, #tpu.memory_space<vmem>>, vector<8x32xbf16>,
    %c6_i32 = arith.constant 6 : i32
    %165 = arith.index_cast %c6_i32 : i32 to index
    %c0_39 = arith.constant 0 : index
    %c0_40 = arith.constant 0 : index
    %166 = vector.load %arg1[%165, %c0_39, %c0_40] : memref<8x8x128xf32, #tpu.memory_space<vmem>>, vector<1x8x128xf32>
    %167 = vector.shape_cast %166 : vector<1x8x128xf32> to vector<8x128xf32>
    %168 = arith.truncf %159 : vector<8x32xf32> to vector<8x32xbf16>
    %cst_41 = arith.constant dense<0.000000e+00> : vector<8x128xf32>
    %169 = tpu.matmul %168, %0, %cst_41 {dimension_numbers = #tpu.dot_dimension_numbers<[1], [0], [0], [1], [0, 0, 1, 1], [], []>} : vector<8x32xbf16>, vector<32x128xbf16>, vector<8x128xf32> -> vector<8x128xf32>
    %170 = arith.addf %167, %169 : vector<8x128xf32>
    %171 = vector.extract_strided_slice %170 {offsets = [0, 0], sizes = [8, 96], strides = [1, 1]} : vector<8x128xf32> to vector<8x96xf32>
    %172 = arith.negf %171 : vector<8x96xf32>
    %173 = math.exp %172 : vector<8x96xf32>
    %cst_42 = arith.constant 1.000000e+00 : f32
    %174 = vector.broadcast %cst_42 : f32 to vector<8x96xf32>
    %175 = arith.addf %174, %173 : vector<8x96xf32>
    %176 = arith.divf %174, %175 : vector<8x96xf32>
    %177 = vector.extract_strided_slice %170 {offsets = [0, 96], sizes = [8, 32], strides = [1, 1]} : vector<8x128xf32> to vector<8x32xf32>
    %178 = math.tanh %177 : vector<8x32xf32>
    %179 = vector.extract_strided_slice %176 {offsets = [0, 0], sizes = [8, 32], strides = [1, 1]} : vector<8x96xf32> to vector<8x32xf32>
    %180 = vector.extract_strided_slice %176 {offsets = [0, 32], sizes = [8, 32], strides = [1, 1]} : vector<8x96xf32> to vector<8x32xf32>
    %181 = vector.extract_strided_slice %176 {offsets = [0, 64], sizes = [8, 32], strides = [1, 1]} : vector<8x96xf32> to vector<8x32xf32>
    %182 = arith.mulf %180, %157 : vector<8x32xf32>
    %183 = arith.mulf %179, %178 : vector<8x32xf32>
    %184 = arith.addf %182, %183 : vector<8x32xf32>
    %185 = math.tanh %184 : vector<8x32xf32>
    %186 = arith.mulf %181, %185 : vector<8x32xf32>
    %c8_i32_43 = arith.constant 8 : i32
    %187 = arith.muli %c6_i32, %c8_i32_43 : i32
    %188 = tpu.assume_multiple %187, 8 : i32
    %189 = arith.truncf %186 : vector<8x32xf32> to vector<8x32xbf16>
    %190 = arith.index_cast %188 : i32 to index
    %c0_44 = arith.constant 0 : index
    %191 = vector.load %arg10[%190, %c0_44] : memref<64x32xbf16, #tpu.memory_space<vmem>>, vector<8x32xbf16>
    tpu.vector_store %arg10[%190, %c0_44], %189 {strides = array<i32>} : memref<64x32xbf16, #tpu.memory_space<vmem>>, vector<8x32xbf16>,
    %c7_i32 = arith.constant 7 : i32
    %192 = arith.index_cast %c7_i32 : i32 to index
    %c0_45 = arith.constant 0 : index
    %c0_46 = arith.constant 0 : index
    %193 = vector.load %arg1[%192, %c0_45, %c0_46] : memref<8x8x128xf32, #tpu.memory_space<vmem>>, vector<1x8x128xf32>
    %194 = vector.shape_cast %193 : vector<1x8x128xf32> to vector<8x128xf32>
    %195 = arith.truncf %186 : vector<8x32xf32> to vector<8x32xbf16>
    %cst_47 = arith.constant dense<0.000000e+00> : vector<8x128xf32>
    %196 = tpu.matmul %195, %0, %cst_47 {dimension_numbers = #tpu.dot_dimension_numbers<[1], [0], [0], [1], [0, 0, 1, 1], [], []>} : vector<8x32xbf16>, vector<32x128xbf16>, vector<8x128xf32> -> vector<8x128xf32>
    %197 = arith.addf %194, %196 : vector<8x128xf32>
    %198 = vector.extract_strided_slice %197 {offsets = [0, 0], sizes = [8, 96], strides = [1, 1]} : vector<8x128xf32> to vector<8x96xf32>
    %199 = arith.negf %198 : vector<8x96xf32>
    %200 = math.exp %199 : vector<8x96xf32>
    %cst_48 = arith.constant 1.000000e+00 : f32
    %201 = vector.broadcast %cst_48 : f32 to vector<8x96xf32>
    %202 = arith.addf %201, %200 : vector<8x96xf32>
    %203 = arith.divf %201, %202 : vector<8x96xf32>
    %204 = vector.extract_strided_slice %197 {offsets = [0, 96], sizes = [8, 32], strides = [1, 1]} : vector<8x128xf32> to vector<8x32xf32>
    %205 = math.tanh %204 : vector<8x32xf32>
    %206 = vector.extract_strided_slice %203 {offsets = [0, 0], sizes = [8, 32], strides = [1, 1]} : vector<8x96xf32> to vector<8x32xf32>
    %207 = vector.extract_strided_slice %203 {offsets = [0, 32], sizes = [8, 32], strides = [1, 1]} : vector<8x96xf32> to vector<8x32xf32>
    %208 = vector.extract_strided_slice %203 {offsets = [0, 64], sizes = [8, 32], strides = [1, 1]} : vector<8x96xf32> to vector<8x32xf32>
    %209 = arith.mulf %207, %184 : vector<8x32xf32>
    %210 = arith.mulf %206, %205 : vector<8x32xf32>
    %211 = arith.addf %209, %210 : vector<8x32xf32>
    %212 = math.tanh %211 : vector<8x32xf32>
    %213 = arith.mulf %208, %212 : vector<8x32xf32>
    %c8_i32_49 = arith.constant 8 : i32
    %214 = arith.muli %c7_i32, %c8_i32_49 : i32
    %215 = tpu.assume_multiple %214, 8 : i32
    %216 = arith.truncf %213 : vector<8x32xf32> to vector<8x32xbf16>
    %217 = arith.index_cast %215 : i32 to index
    %c0_50 = arith.constant 0 : index
    %218 = vector.load %arg10[%217, %c0_50] : memref<64x32xbf16, #tpu.memory_space<vmem>>, vector<8x32xbf16>
    tpu.vector_store %arg10[%217, %c0_50], %216 {strides = array<i32>} : memref<64x32xbf16, #tpu.memory_space<vmem>>, vector<8x32xbf16>,
    %c8_i32_51 = arith.constant 8 : i32
    %c0_52 = arith.constant 0 : index
    %c0_53 = arith.constant 0 : index
    %219 = vector.load %arg8[%c0_52, %c0_53] : memref<8x32xf32, #tpu.memory_space<vmem>>, vector<8x32xf32>
    tpu.vector_store %arg8[%c0_52, %c0_53], %213 {strides = array<i32>} : memref<8x32xf32, #tpu.memory_space<vmem>>, vector<8x32xf32>,
    %c0_54 = arith.constant 0 : index
    %c0_55 = arith.constant 0 : index
    %220 = vector.load %arg9[%c0_54, %c0_55] : memref<8x32xf32, #tpu.memory_space<vmem>>, vector<8x32xf32>
    tpu.vector_store %arg9[%c0_54, %c0_55], %211 {strides = array<i32>} : memref<8x32xf32, #tpu.memory_space<vmem>>, vector<8x32xf32>,
    %c0_56 = arith.constant 0 : index
    %c0_57 = arith.constant 0 : index
    %221 = vector.load %arg10[%c0_56, %c0_57] : memref<64x32xbf16, #tpu.memory_space<vmem>>, vector<64x32xbf16>
    %c0_58 = arith.constant 0 : index
    %c0_59 = arith.constant 0 : index
    %222 = vector.load %arg3[%c0_58, %c0_59] : memref<32x128xbf16, #tpu.memory_space<vmem>>, vector<32x128xbf16>
    %cst_60 = arith.constant dense<0.000000e+00> : vector<64x128xf32>
    %223 = tpu.matmul %221, %222, %cst_60 {dimension_numbers = #tpu.dot_dimension_numbers<[1], [0], [0], [1], [0, 0, 1, 1], [], []>} : vector<64x32xbf16>, vector<32x128xbf16>, vector<64x128xf32> -> vector<64x128xf32>
    %c0_61 = arith.constant 0 : index
    %c0_62 = arith.constant 0 : index
    %224 = vector.load %arg4[%c0_61, %c0_62] : memref<1x128xf32, #tpu.memory_space<vmem>>, vector<1x128xf32>
    %225 = vector.broadcast %224 : vector<1x128xf32> to vector<64x128xf32>
    %226 = arith.addf %223, %225 : vector<64x128xf32>
    %227 = vector.shape_cast %226 : vector<64x128xf32> to vector<8x8x128xf32>
    %c0_63 = arith.constant 0 : index
    %c0_64 = arith.constant 0 : index
    %c0_65 = arith.constant 0 : index
    %228 = vector.load %arg7[%c0_63, %c0_64, %c0_65] : memref<8x8x128xf32, #tpu.memory_space<vmem>>, vector<8x8x128xf32>
    tpu.vector_store %arg7[%c0_63, %c0_64, %c0_65], %227 {strides = array<i32>} : memref<8x8x128xf32, #tpu.memory_space<vmem>>, vector<8x8x128xf32>,
    return
  }
  func.func @transform_0(%arg0: i32) -> (i32, i32, i32) {
    %c0_i32 = arith.constant 0 : i32
    %c0_i32_0 = arith.constant 0 : i32
    %c0_i32_1 = arith.constant 0 : i32
    return %c0_i32, %arg0, %c0_i32_0 : i32, i32, i32
  }
  func.func @transform_1(%arg0: i32) -> (i32, i32) {
    %c0_i32 = arith.constant 0 : i32
    %c0_i32_0 = arith.constant 0 : i32
    %c0_i32_1 = arith.constant 0 : i32
    return %c0_i32, %c0_i32_0 : i32, i32
  }
  func.func @transform_2(%arg0: i32) -> (i32, i32) {
    %c0_i32 = arith.constant 0 : i32
    %c0_i32_0 = arith.constant 0 : i32
    %c0_i32_1 = arith.constant 0 : i32
    return %c0_i32, %c0_i32_0 : i32, i32
  }
  func.func @transform_3(%arg0: i32) -> (i32, i32) {
    %c0_i32 = arith.constant 0 : i32
    %c0_i32_0 = arith.constant 0 : i32
    %c0_i32_1 = arith.constant 0 : i32
    return %c0_i32, %c0_i32_0 : i32, i32
  }
  func.func @transform_4(%arg0: i32) -> (i32, i32) {
    %c0_i32 = arith.constant 0 : i32
    %c0_i32_0 = arith.constant 0 : i32
    return %arg0, %c0_i32 : i32, i32
  }
  func.func @transform_5(%arg0: i32) -> (i32, i32) {
    %c0_i32 = arith.constant 0 : i32
    %c0_i32_0 = arith.constant 0 : i32
    return %arg0, %c0_i32 : i32, i32
  }
  func.func @transform_6(%arg0: i32) -> (i32, i32, i32) {
    %c0_i32 = arith.constant 0 : i32
    %c0_i32_0 = arith.constant 0 : i32
    %c0_i32_1 = arith.constant 0 : i32
    return %c0_i32, %arg0, %c0_i32_0 : i32, i32, i32
  }
  func.func @transform_7(%arg0: i32) -> (i32, i32) {
    %c0_i32 = arith.constant 0 : i32
    %c0_i32_0 = arith.constant 0 : i32
    return %arg0, %c0_i32 : i32, i32
  }
  func.func @transform_8(%arg0: i32) -> (i32, i32) {
    %c0_i32 = arith.constant 0 : i32
    %c0_i32_0 = arith.constant 0 : i32
    return %arg0, %c0_i32 : i32, i32
  }
}

</mosaic_0001>

<llo_original>
// kernel: tpu_custom_call.1
$region0: #{tpu_custom_call.1}
  #allocation0 [shape = 'u32[]', space=smem, size = 0x4, offset = 0x4, fixed_abs, tag = 'smem constant byte address 0x4 - core index']
  #allocation1 [shape = 'u32[144,128]{1,0:T(1,128)}', space=vmem, size = 0x12000, scoped, tag = 'internal scratch']
  #allocation2 [shape = 'bf16[64,32]{1,0:T(8,128)(2,1)}', space=vmem, size = 0x4000, scoped, tag = 'scratch operand']
  %s0 = inlined_call_operand.hbm [shape: f32[8,8,128], index: 0, kind: input, shape index: {}]
  %s1 = inlined_call_operand.hbm [shape: bf16[32,128], index: 1, kind: input, shape index: {}]
  %s2 = inlined_call_operand.hbm [shape: bf16[32,128], index: 2, kind: input, shape index: {}]
  %s3 = inlined_call_operand.vmem [shape: f32[1,128], index: 3, kind: input, shape index: {}]
  %s4 = inlined_call_operand.hbm [shape: f32[8,32], index: 4, kind: input, shape index: {}]
  %s5 = inlined_call_operand.vmem [shape: f32[8,32], index: 5, kind: input, shape index: {}]
  %s6 = inlined_call_operand.hbm [shape: f32[8,8,128], index: 6, kind: output, shape index: {0}]
  %s7 = inlined_call_operand.hbm [shape: f32[8,32], index: 7, kind: output, shape index: {1}]
  %s8 = inlined_call_operand.hbm [shape: f32[8,32], index: 8, kind: output, shape index: {2}]
  %9 = xla_tuple %s6, %s7, %s8
  %s10 = sld [smem:[#allocation0]]
  $region66: #{tpu_custom_call.1} parent=0
    _
  %s12 = ssub.s32 1, %s10
  %s13 = scalar_select 0, %s12, %s10
  $region1: #{tpu_custom_call.1} parent=0
    #allocation3 [shape = 'u8[32768]{0}', space=vmem, size = 0x8000, scoped, tag = 'input window, operand 0, single buffered']
    #allocation4 [shape = 's32[1]{0}', space=sflag, size = 0x4, scoped, tag = 'scoped memory for tpu_custom_call.1']
    #allocation5 [shape = 's32[1]{0}', space=sflag, size = 0x4, scoped, tag = 'scoped memory for tpu_custom_call.1']
    #allocation6 [shape = 'u8[8192]{0}', space=vmem, size = 0x2000, scoped, tag = 'input window, operand 1, single buffered']
    #allocation7 [shape = 's32[1]{0}', space=sflag, size = 0x4, scoped, tag = 'scoped memory for tpu_custom_call.1']
    #allocation8 [shape = 'u8[8192]{0}', space=vmem, size = 0x2000, scoped, tag = 'input window, operand 2, single buffered']
    #allocation9 [shape = 'u8[4096]{0}', space=vmem, size = 0x1000, scoped, tag = 'input window, operand 4, single buffered']
    #allocation10 [shape = 's32[1]{0}', space=sflag, size = 0x4, scoped, tag = 'scoped memory for tpu_custom_call.1']
    #allocation11 [shape = 'u8[32768]{0}', space=vmem, size = 0x8000, scoped, tag = 'output window, operand 0, single buffered']
    #allocation12 [shape = 'u8[4096]{0}', space=vmem, size = 0x1000, scoped, tag = 'output window, operand 1, single buffered']
    #allocation13 [shape = 's32[1]{0}', space=sflag, size = 0x4, scoped, tag = 'scoped memory for tpu_custom_call.1']
    #allocation14 [shape = 'u8[4096]{0}', space=vmem, size = 0x1000, scoped, tag = 'output window, operand 2, single buffered']
    %14 = vsyncpa [#allocation4], 0
    %15 = vsyncpa [#allocation7], 0
    %16 = vsyncpa [#allocation10], 0
    %17 = vsyncpa [#allocation5], 0
    %18 = vsyncpa [#allocation13], 0
    // Predicated region
    $region2: #{tpu_custom_call.1} parent=1 // pred_check
      _
    $region3: #{tpu_custom_call.1} parent=1 // pred_check_branch
      %20 = sbr.rel (0) target = $region5
    $region4: #{tpu_custom_call.1} parent=1 // pred_region
      %s22 = ssub.s32 1024, 1024
      %23 = vsyncadd [#allocation4], %s22
      %s24 = sshll.u32 [#allocation3], 4
      %s25 = int_to_ptr.vmem [resolvable:$true] %s24
      %30 = dma.hbm_to_vmem [thread:$0]  %s0, 1024, %s25, [#allocation4], 128, 128, 8
    $region5: #{tpu_custom_call.1} parent=1 // pred_fallthru
      _
    // Predicated region
    $region6: #{tpu_custom_call.1} parent=1 // pred_check
      _
    $region7: #{tpu_custom_call.1} parent=1 // pred_check_branch
      %32 = sbr.rel (0) target = $region9
    $region8: #{tpu_custom_call.1} parent=1 // pred_region
      %s34 = ssub.s32 256, 256
      %35 = vsyncadd [#allocation7], %s34
      %s36 = sshll.u32 [#allocation6], 4
      %s37 = int_to_ptr.vmem [resolvable:$true] %s36
      %42 = dma.hbm_to_vmem [thread:$0]  %s1, 256, %s37, [#allocation7], 64, 64, 4
    $region9: #{tpu_custom_call.1} parent=1 // pred_fallthru
      _
    // Predicated region
    $region10: #{tpu_custom_call.1} parent=1 // pred_check
      _
    $region11: #{tpu_custom_call.1} parent=1 // pred_check_branch
      %44 = sbr.rel (0) target = $region13
    $region12: #{tpu_custom_call.1} parent=1 // pred_region
      %s46 = ssub.s32 256, 256
      %47 = vsyncadd [#allocation7], %s46
      %s48 = sshll.u32 [#allocation8], 4
      %s49 = int_to_ptr.vmem [resolvable:$true] %s48
      %54 = dma.hbm_to_vmem [thread:$0]  %s2, 256, %s49, [#allocation7], 64, 64, 4
    $region13: #{tpu_custom_call.1} parent=1 // pred_fallthru
      _
    // Predicated region
    $region14: #{tpu_custom_call.1} parent=1 // pred_check
      _
    $region15: #{tpu_custom_call.1} parent=1 // pred_check_branch
      %56 = sbr.rel (0) target = $region17
    $region16: #{tpu_custom_call.1} parent=1 // pred_region
      _
    $region17: #{tpu_custom_call.1} parent=1 // pred_fallthru
      _
    // Predicated region
    $region18: #{tpu_custom_call.1} parent=1 // pred_check
      _
    $region19: #{tpu_custom_call.1} parent=1 // pred_check_branch
      %58 = sbr.rel (0) target = $region21
    $region20: #{tpu_custom_call.1} parent=1 // pred_region
      %s60 = ssub.s32 128, 128
      %61 = vsyncadd [#allocation10], %s60
      %s63 = sshll.u32 [#allocation9], 4
      %s64 = int_to_ptr.vmem [resolvable:$true] %s63
      %66 = dma.hbm_to_vmem [thread:$0]  %s4, 128, %s64, [#allocation10]
    $region21: #{tpu_custom_call.1} parent=1 // pred_fallthru
      _
    // Predicated region
    $region22: #{tpu_custom_call.1} parent=1 // pred_check
      _
    $region23: #{tpu_custom_call.1} parent=1 // pred_check_branch
      %68 = sbr.rel (0) target = $region25
    $region24: #{tpu_custom_call.1} parent=1 // pred_region
      _
    $region25: #{tpu_custom_call.1} parent=1 // pred_fallthru
      _
    // Predicated region
    $region26: #{tpu_custom_call.1} parent=1 // pred_check
      _
    $region27: #{tpu_custom_call.1} parent=1 // pred_check_branch
      %70 = sbr.rel (0) target = $region29
    $region28: #{tpu_custom_call.1} parent=1 // pred_region
      %71 = dma.done [#allocation4], 1024
    $region29: #{tpu_custom_call.1} parent=1 // pred_fallthru
      _
    // Predicated region
    $region30: #{tpu_custom_call.1} parent=1 // pred_check
      _
    $region31: #{tpu_custom_call.1} parent=1 // pred_check_branch
      %73 = sbr.rel (0) target = $region33
    $region32: #{tpu_custom_call.1} parent=1 // pred_region
      %74 = dma.done [#allocation7], 256
    $region33: #{tpu_custom_call.1} parent=1 // pred_fallthru
      _
    // Predicated region
    $region34: #{tpu_custom_call.1} parent=1 // pred_check
      _
    $region35: #{tpu_custom_call.1} parent=1 // pred_check_branch
      %76 = sbr.rel (0) target = $region37
    $region36: #{tpu_custom_call.1} parent=1 // pred_region
      %77 = dma.done [#allocation7], 256
    $region37: #{tpu_custom_call.1} parent=1 // pred_fallthru
      _
    // Predicated region
    $region38: #{tpu_custom_call.1} parent=1 // pred_check
      _
    $region39: #{tpu_custom_call.1} parent=1 // pred_check_branch
      %79 = sbr.rel (0) target = $region41
    $region40: #{tpu_custom_call.1} parent=1 // pred_region
      %80 = dma.done [#allocation10], 128
    $region41: #{tpu_custom_call.1} parent=1 // pred_fallthru
      _
    %v82 = vld [vmem:[#allocation6] sm:$0xf]
    %v83 = vld [vmem:[#allocation6 + $0x4] sm:$0xf]
    %v84 = vld [vmem:[#allocation6 + $0x8] sm:$0xf]
    %v85 = vld [vmem:[#allocation6 + $0xc] sm:$0xf]
    %v86 = vld [vmem:[#allocation9] sm:$0xff]
    %v87 = vld [vmem:[%s5] sm:$0xff]
    %v88 = vld [vmem:[#allocation3] sm:$0xff]
    %v89 = vpack.c.bf16 %v86, %v86
    %v94 = vunpack.c.l.b16 %v82
    %v95 = vunpack.c.l.b16 %v83
    %v96 = vunpack.c.l.b16 %v84
    %v97 = vunpack.c.l.b16 %v85
    %v98 = vpack.c.b16 %v95, %v94
    %v99 = vpack.c.b16 %v97, %v96
    %vm102 = vcmask 261120
    %v104 = vsel %vm102, %v89, 0
    %106 = vmatprep.subr.bf16.mxu0 0
    %107 = vmatpush1.bf16.msra.mxu0 0
    %108 = vmatprep.subr.bf16.mxu0 0
    %109 = vmatpush1.bf16.msra.mxu0 0
    %110 = vmatprep.subr.bf16.mxu0 0
    %111 = vmatpush1.bf16.msra.mxu0 0
    %112 = vmatprep.subr.bf16.mxu0 0
    %113 = vmatpush1.bf16.msra.mxu0 0
    %114 = vmatprep.subr.bf16.mxu0 0
    %115 = vmatpush1.bf16.msra.mxu0 0
    %116 = vmatprep.subr.bf16.mxu0 0
    %117 = vmatpush1.bf16.msra.mxu0 0
    %118 = vmatprep.subr.bf16.mxu0 0
    %119 = vmatpush1.bf16.msra.mxu0 %v99
    %120 = vmatprep.subr.bf16.mxu0 0
    %121 = vmatpush1.bf16.msra.mxu0 %v98
    %122 = vmatprep.subr.bf16.mxu0 0
    %123 = vmatpush2.bf16.msra.mxu0 0
    %124 = vmatprep.subr.bf16.mxu0 0
    %125 = vmatpush2.bf16.msra.mxu0 0
    %126 = vmatprep.subr.bf16.mxu0 0
    %127 = vmatpush2.bf16.msra.mxu0 0
    %128 = vmatprep.subr.bf16.mxu0 0
    %129 = vmatpush2.bf16.msra.mxu0 0
    %130 = vmatprep.subr.bf16.mxu0 0
    %131 = vmatpush2.bf16.msra.mxu0 0
    %132 = vmatprep.subr.bf16.mxu0 0
    %133 = vmatpush2.bf16.msra.mxu0 0
    %134 = vmatprep.subr.bf16.mxu0 0
    %135 = vmatpush2.bf16.msra.mxu0 0
    %136 = vmatprep.subr.bf16.mxu0 0
    %137 = vmatpush2.bf16.msra.mxu0 0
    %138 = vmatprep.mubr.bf16.mxu0 0
    %139 = vmatmul.mubr.bf16.gmra.mxu0 %v104
    %v140 = vpop.f32.mrf.mxu0
    %v141 = vadd.f32 0.0, %v140
    %v142 = vpop.f32.mrf.mxu0
    %v143 = vpop.f32.mrf.mxu0
    %v144 = vpop.f32.mrf.mxu0
    %145 = vdwg.mxu0
    %v146 = vadd.f32 %v88, %v141
    %v147 = vxor.u32 %v146, 2147483648
    %v148 = vmul.f32 %v147, 1.442695
    %v149 = vpow.pop %v148
    %v150 = vadd.f32 %v149, 1.0
    %v151 = vrcp.pop %v150
    %v152 = vmul.f32 1.0, %v151
    %v153 = vtanh.pop %v146
    %155 = vrot.lane.b32.xlu0 %v87, 32
    %v156 = vpop.permute.xlu0 %155
    %v158 = vmul.f32 %v152, %v156
    %160 = vrot.lane.b32.xlu0 %v153, 32
    %v161 = vpop.permute.xlu0 %160
    %v163 = vmul.f32 %v152, %v161
    %165 = vrot.lane.b32.xlu0 %v163, 32
    %v166 = vpop.permute.xlu0 %165
    %v168 = vadd.f32 %v158, %v166
    %v169 = vtanh.pop %v168
    %171 = vrot.lane.b32.xlu0 %v169, 32
    %v172 = vpop.permute.xlu0 %171
    %v174 = vmul.f32 %v152, %v172
    %v175 = vpack.c.bf16 %v174, %v174
    %v177 = vunpack.c.l.b16 %v175
    %v178 = vpack.c.b16 %v177, %v177
    %179 = vrot.lane.b32.xlu0 %v178, 64
    %v180 = vpop.permute.xlu0 %179
    %vm182 = vcmask 257024
    %183 = vst.msk [vmem:[#allocation2] sm:$0xf] %vm182, %v180
    %s184 = scalar_lea.vmem [#allocation3], 8
    %v185 = vld [vmem:[%s184] sm:$0xff]
    %186 = vrot.lane.b32.xlu0 %v175, 64
    %v187 = vpop.permute.xlu0 %186
    %v189 = vsel %vm102, %v187, 0
    %191 = vmatprep.subr.bf16.mxu0 0
    %192 = vmatpush1.bf16.msra.mxu0 0
    %193 = vmatprep.subr.bf16.mxu0 0
    %194 = vmatpush1.bf16.msra.mxu0 0
    %195 = vmatprep.subr.bf16.mxu0 0
    %196 = vmatpush1.bf16.msra.mxu0 0
    %197 = vmatprep.subr.bf16.mxu0 0
    %198 = vmatpush1.bf16.msra.mxu0 0
    %199 = vmatprep.subr.bf16.mxu0 0
    %200 = vmatpush1.bf16.msra.mxu0 0
    %201 = vmatprep.subr.bf16.mxu0 0
    %202 = vmatpush1.bf16.msra.mxu0 0
    %203 = vmatprep.subr.bf16.mxu0 0
    %204 = vmatpush1.bf16.msra.mxu0 %v99
    %205 = vmatprep.subr.bf16.mxu0 0
    %206 = vmatpush1.bf16.msra.mxu0 %v98
    %207 = vmatprep.subr.bf16.mxu0 0
    %208 = vmatpush2.bf16.msra.mxu0 0
    %209 = vmatprep.subr.bf16.mxu0 0
    %210 = vmatpush2.bf16.msra.mxu0 0
    %211 = vmatprep.subr.bf16.mxu0 0
    %212 = vmatpush2.bf16.msra.mxu0 0
    %213 = vmatprep.subr.bf16.mxu0 0
    %214 = vmatpush2.bf16.msra.mxu0 0
    %215 = vmatprep.subr.bf16.mxu0 0
    %216 = vmatpush2.bf16.msra.mxu0 0
    %217 = vmatprep.subr.bf16.mxu0 0
    %218 = vmatpush2.bf16.msra.mxu0 0
    %219 = vmatprep.subr.bf16.mxu0 0
    %220 = vmatpush2.bf16.msra.mxu0 0
    %221 = vmatprep.subr.bf16.mxu0 0
    %222 = vmatpush2.bf16.msra.mxu0 0
    %223 = vmatprep.mubr.bf16.mxu0 0
    %224 = vmatmul.mubr.bf16.gmra.mxu0 %v189
    %v225 = vpop.f32.mrf.mxu0
    %v226 = vadd.f32 0.0, %v225
    %v227 = vpop.f32.mrf.mxu0
    %v228 = vpop.f32.mrf.mxu0
    %v229 = vpop.f32.mrf.mxu0
    %230 = vdwg.mxu0
    %v231 = vadd.f32 %v185, %v226
    %v232 = vxor.u32 %v231, 2147483648
    %v233 = vmul.f32 %v232, 1.442695
    %v234 = vpow.pop %v233
    %v235 = vadd.f32 %v234, 1.0
    %v236 = vrcp.pop %v235
    %v237 = vmul.f32 1.0, %v236
    %v238 = vtanh.pop %v231
    %v239 = vmul.f32 %v237, %v168
    %241 = vrot.lane.b32.xlu0 %v238, 32
    %v242 = vpop.permute.xlu0 %241
    %v244 = vmul.f32 %v237, %v242
    %246 = vrot.lane.b32.xlu0 %v244, 32
    %v247 = vpop.permute.xlu0 %246
    %v249 = vadd.f32 %v239, %v247
    %v250 = vtanh.pop %v249
    %252 = vrot.lane.b32.xlu0 %v250, 32
    %v253 = vpop.permute.xlu0 %252
    %v255 = vmul.f32 %v237, %v253
    %v256 = vpack.c.bf16 %v255, %v255
    %v258 = vunpack.c.l.b16 %v256
    %v259 = vpack.c.b16 %v258, %v258
    %260 = vrot.lane.b32.xlu0 %v259, 64
    %v261 = vpop.permute.xlu0 %260
    %s263 = scalar_lea.vmem [#allocation2], 4
    %264 = vst.msk [vmem:[%s263] sm:$0xf] %vm182, %v261
    %s265 = scalar_lea.vmem [#allocation3], 16
    %v266 = vld [vmem:[%s265] sm:$0xff]
    %267 = vrot.lane.b32.xlu0 %v256, 64
    %v268 = vpop.permute.xlu0 %267
    %v270 = vsel %vm102, %v268, 0
    %272 = vmatprep.subr.bf16.mxu0 0
    %273 = vmatpush1.bf16.msra.mxu0 0
    %274 = vmatprep.subr.bf16.mxu0 0
    %275 = vmatpush1.bf16.msra.mxu0 0
    %276 = vmatprep.subr.bf16.mxu0 0
    %277 = vmatpush1.bf16.msra.mxu0 0
    %278 = vmatprep.subr.bf16.mxu0 0
    %279 = vmatpush1.bf16.msra.mxu0 0
    %280 = vmatprep.subr.bf16.mxu0 0
    %281 = vmatpush1.bf16.msra.mxu0 0
    %282 = vmatprep.subr.bf16.mxu0 0
    %283 = vmatpush1.bf16.msra.mxu0 0
    %284 = vmatprep.subr.bf16.mxu0 0
    %285 = vmatpush1.bf16.msra.mxu0 %v99
    %286 = vmatprep.subr.bf16.mxu0 0
    %287 = vmatpush1.bf16.msra.mxu0 %v98
    %288 = vmatprep.subr.bf16.mxu0 0
    %289 = vmatpush2.bf16.msra.mxu0 0
    %290 = vmatprep.subr.bf16.mxu0 0
    %291 = vmatpush2.bf16.msra.mxu0 0
    %292 = vmatprep.subr.bf16.mxu0 0
    %293 = vmatpush2.bf16.msra.mxu0 0
    %294 = vmatprep.subr.bf16.mxu0 0
    %295 = vmatpush2.bf16.msra.mxu0 0
    %296 = vmatprep.subr.bf16.mxu0 0
    %297 = vmatpush2.bf16.msra.mxu0 0
    %298 = vmatprep.subr.bf16.mxu0 0
    %299 = vmatpush2.bf16.msra.mxu0 0
    %300 = vmatprep.subr.bf16.mxu0 0
    %301 = vmatpush2.bf16.msra.mxu0 0
    %302 = vmatprep.subr.bf16.mxu0 0
    %303 = vmatpush2.bf16.msra.mxu0 0
    %304 = vmatprep.mubr.bf16.mxu0 0
    %305 = vmatmul.mubr.bf16.gmra.mxu0 %v270
    %v306 = vpop.f32.mrf.mxu0
    %v307 = vadd.f32 0.0, %v306
    %v308 = vpop.f32.mrf.mxu0
    %v309 = vpop.f32.mrf.mxu0
    %v310 = vpop.f32.mrf.mxu0
    %311 = vdwg.mxu0
    %v312 = vadd.f32 %v266, %v307
    %v313 = vxor.u32 %v312, 2147483648
    %v314 = vmul.f32 %v313, 1.442695
    %v315 = vpow.pop %v314
    %v316 = vadd.f32 %v315, 1.0
    %v317 = vrcp.pop %v316
    %v318 = vmul.f32 1.0, %v317
    %v319 = vtanh.pop %v312
    %v320 = vmul.f32 %v318, %v249
    %322 = vrot.lane.b32.xlu0 %v319, 32
    %v323 = vpop.permute.xlu0 %322
    %v325 = vmul.f32 %v318, %v323
    %327 = vrot.lane.b32.xlu0 %v325, 32
    %v328 = vpop.permute.xlu0 %327
    %v330 = vadd.f32 %v320, %v328
    %v331 = vtanh.pop %v330
    %333 = vrot.lane.b32.xlu0 %v331, 32
    %v334 = vpop.permute.xlu0 %333
    %v336 = vmul.f32 %v318, %v334
    %v337 = vpack.c.bf16 %v336, %v336
    %v339 = vunpack.c.l.b16 %v337
    %v340 = vpack.c.b16 %v339, %v339
    %341 = vrot.lane.b32.xlu0 %v340, 64
    %v342 = vpop.permute.xlu0 %341
    %s344 = scalar_lea.vmem [#allocation2], 8
    %345 = vst.msk [vmem:[%s344] sm:$0xf] %vm182, %v342
    %s346 = scalar_lea.vmem [#allocation3], 24
    %v347 = vld [vmem:[%s346] sm:$0xff]
    %348 = vrot.lane.b32.xlu0 %v337, 64
    %v349 = vpop.permute.xlu0 %348
    %v351 = vsel %vm102, %v349, 0
    %353 = vmatprep.subr.bf16.mxu0 0
    %354 = vmatpush1.bf16.msra.mxu0 0
    %355 = vmatprep.subr.bf16.mxu0 0
    %356 = vmatpush1.bf16.msra.mxu0 0
    %357 = vmatprep.subr.bf16.mxu0 0
    %358 = vmatpush1.bf16.msra.mxu0 0
    %359 = vmatprep.subr.bf16.mxu0 0
    %360 = vmatpush1.bf16.msra.mxu0 0
    %361 = vmatprep.subr.bf16.mxu0 0
    %362 = vmatpush1.bf16.msra.mxu0 0
    %363 = vmatprep.subr.bf16.mxu0 0
    %364 = vmatpush1.bf16.msra.mxu0 0
    %365 = vmatprep.subr.bf16.mxu0 0
    %366 = vmatpush1.bf16.msra.mxu0 %v99
    %367 = vmatprep.subr.bf16.mxu0 0
    %368 = vmatpush1.bf16.msra.mxu0 %v98
    %369 = vmatprep.subr.bf16.mxu0 0
    %370 = vmatpush2.bf16.msra.mxu0 0
    %371 = vmatprep.subr.bf16.mxu0 0
    %372 = vmatpush2.bf16.msra.mxu0 0
    %373 = vmatprep.subr.bf16.mxu0 0
    %374 = vmatpush2.bf16.msra.mxu0 0
    %375 = vmatprep.subr.bf16.mxu0 0
    %376 = vmatpush2.bf16.msra.mxu0 0
    %377 = vmatprep.subr.bf16.mxu0 0
    %378 = vmatpush2.bf16.msra.mxu0 0
    %379 = vmatprep.subr.bf16.mxu0 0
    %380 = vmatpush2.bf16.msra.mxu0 0
    %381 = vmatprep.subr.bf16.mxu0 0
    %382 = vmatpush2.bf16.msra.mxu0 0
    %383 = vmatprep.subr.bf16.mxu0 0
    %384 = vmatpush2.bf16.msra.mxu0 0
    %385 = vmatprep.mubr.bf16.mxu0 0
    %386 = vmatmul.mubr.bf16.gmra.mxu0 %v351
    %v387 = vpop.f32.mrf.mxu0
    %v388 = vadd.f32 0.0, %v387
    %v389 = vpop.f32.mrf.mxu0
    %v390 = vpop.f32.mrf.mxu0
    %v391 = vpop.f32.mrf.mxu0
    %392 = vdwg.mxu0
    %v393 = vadd.f32 %v347, %v388
    %v394 = vxor.u32 %v393, 2147483648
    %v395 = vmul.f32 %v394, 1.442695
    %v396 = vpow.pop %v395
    %v397 = vadd.f32 %v396, 1.0
    %v398 = vrcp.pop %v397
    %v399 = vmul.f32 1.0, %v398
    %v400 = vtanh.pop %v393
    %v401 = vmul.f32 %v399, %v330
    %403 = vrot.lane.b32.xlu0 %v400, 32
    %v404 = vpop.permute.xlu0 %403
    %v406 = vmul.f32 %v399, %v404
    %408 = vrot.lane.b32.xlu0 %v406, 32
    %v409 = vpop.permute.xlu0 %408
    %v411 = vadd.f32 %v401, %v409
    %v412 = vtanh.pop %v411
    %414 = vrot.lane.b32.xlu0 %v412, 32
    %v415 = vpop.permute.xlu0 %414
    %v417 = vmul.f32 %v399, %v415
    %v418 = vpack.c.bf16 %v417, %v417
    %v420 = vunpack.c.l.b16 %v418
    %v421 = vpack.c.b16 %v420, %v420
    %422 = vrot.lane.b32.xlu0 %v421, 64
    %v423 = vpop.permute.xlu0 %422
    %s425 = scalar_lea.vmem [#allocation2], 12
    %426 = vst.msk [vmem:[%s425] sm:$0xf] %vm182, %v423
    %s427 = scalar_lea.vmem [#allocation3], 32
    %v428 = vld [vmem:[%s427] sm:$0xff]
    %429 = vrot.lane.b32.xlu0 %v418, 64
    %v430 = vpop.permute.xlu0 %429
    %v432 = vsel %vm102, %v430, 0
    %434 = vmatprep.subr.bf16.mxu0 0
    %435 = vmatpush1.bf16.msra.mxu0 0
    %436 = vmatprep.subr.bf16.mxu0 0
    %437 = vmatpush1.bf16.msra.mxu0 0
    %438 = vmatprep.subr.bf16.mxu0 0
    %439 = vmatpush1.bf16.msra.mxu0 0
    %440 = vmatprep.subr.bf16.mxu0 0
    %441 = vmatpush1.bf16.msra.mxu0 0
    %442 = vmatprep.subr.bf16.mxu0 0
    %443 = vmatpush1.bf16.msra.mxu0 0
    %444 = vmatprep.subr.bf16.mxu0 0
    %445 = vmatpush1.bf16.msra.mxu0 0
    %446 = vmatprep.subr.bf16.mxu0 0
    %447 = vmatpush1.bf16.msra.mxu0 %v99
    %448 = vmatprep.subr.bf16.mxu0 0
    %449 = vmatpush1.bf16.msra.mxu0 %v98
    %450 = vmatprep.subr.bf16.mxu0 0
    %451 = vmatpush2.bf16.msra.mxu0 0
    %452 = vmatprep.subr.bf16.mxu0 0
    %453 = vmatpush2.bf16.msra.mxu0 0
    %454 = vmatprep.subr.bf16.mxu0 0
    %455 = vmatpush2.bf16.msra.mxu0 0
    %456 = vmatprep.subr.bf16.mxu0 0
    %457 = vmatpush2.bf16.msra.mxu0 0
    %458 = vmatprep.subr.bf16.mxu0 0
    %459 = vmatpush2.bf16.msra.mxu0 0
    %460 = vmatprep.subr.bf16.mxu0 0
    %461 = vmatpush2.bf16.msra.mxu0 0
    %462 = vmatprep.subr.bf16.mxu0 0
    %463 = vmatpush2.bf16.msra.mxu0 0
    %464 = vmatprep.subr.bf16.mxu0 0
    %465 = vmatpush2.bf16.msra.mxu0 0
    %466 = vmatprep.mubr.bf16.mxu0 0
    %467 = vmatmul.mubr.bf16.gmra.mxu0 %v432
    %v468 = vpop.f32.mrf.mxu0
    %v469 = vadd.f32 0.0, %v468
    %v470 = vpop.f32.mrf.mxu0
    %v471 = vpop.f32.mrf.mxu0
    %v472 = vpop.f32.mrf.mxu0
    %473 = vdwg.mxu0
    %v474 = vadd.f32 %v428, %v469
    %v475 = vxor.u32 %v474, 2147483648
    %v476 = vmul.f32 %v475, 1.442695
    %v477 = vpow.pop %v476
    %v478 = vadd.f32 %v477, 1.0
    %v479 = vrcp.pop %v478
    %v480 = vmul.f32 1.0, %v479
    %v481 = vtanh.pop %v474
    %v482 = vmul.f32 %v480, %v411
    %484 = vrot.lane.b32.xlu0 %v481, 32
    %v485 = vpop.permute.xlu0 %484
    %v487 = vmul.f32 %v480, %v485
    %489 = vrot.lane.b32.xlu0 %v487, 32
    %v490 = vpop.permute.xlu0 %489
    %v492 = vadd.f32 %v482, %v490
    %v493 = vtanh.pop %v492
    %495 = vrot.lane.b32.xlu0 %v493, 32
    %v496 = vpop.permute.xlu0 %495
    %v498 = vmul.f32 %v480, %v496
    %v499 = vpack.c.bf16 %v498, %v498
    %v501 = vunpack.c.l.b16 %v499
    %v502 = vpack.c.b16 %v501, %v501
    %503 = vrot.lane.b32.xlu0 %v502, 64
    %v504 = vpop.permute.xlu0 %503
    %s506 = scalar_lea.vmem [#allocation2], 16
    %507 = vst.msk [vmem:[%s506] sm:$0xf] %vm182, %v504
    %s508 = scalar_lea.vmem [#allocation3], 40
    %v509 = vld [vmem:[%s508] sm:$0xff]
    %510 = vrot.lane.b32.xlu0 %v499, 64
    %v511 = vpop.permute.xlu0 %510
    %v513 = vsel %vm102, %v511, 0
    %515 = vmatprep.subr.bf16.mxu0 0
    %516 = vmatpush1.bf16.msra.mxu0 0
    %517 = vmatprep.subr.bf16.mxu0 0
    %518 = vmatpush1.bf16.msra.mxu0 0
    %519 = vmatprep.subr.bf16.mxu0 0
    %520 = vmatpush1.bf16.msra.mxu0 0
    %521 = vmatprep.subr.bf16.mxu0 0
    %522 = vmatpush1.bf16.msra.mxu0 0
    %523 = vmatprep.subr.bf16.mxu0 0
    %524 = vmatpush1.bf16.msra.mxu0 0
    %525 = vmatprep.subr.bf16.mxu0 0
    %526 = vmatpush1.bf16.msra.mxu0 0
    %527 = vmatprep.subr.bf16.mxu0 0
    %528 = vmatpush1.bf16.msra.mxu0 %v99
    %529 = vmatprep.subr.bf16.mxu0 0
    %530 = vmatpush1.bf16.msra.mxu0 %v98
    %531 = vmatprep.subr.bf16.mxu0 0
    %532 = vmatpush2.bf16.msra.mxu0 0
    %533 = vmatprep.subr.bf16.mxu0 0
    %534 = vmatpush2.bf16.msra.mxu0 0
    %535 = vmatprep.subr.bf16.mxu0 0
    %536 = vmatpush2.bf16.msra.mxu0 0
    %537 = vmatprep.subr.bf16.mxu0 0
    %538 = vmatpush2.bf16.msra.mxu0 0
    %539 = vmatprep.subr.bf16.mxu0 0
    %540 = vmatpush2.bf16.msra.mxu0 0
    %541 = vmatprep.subr.bf16.mxu0 0
    %542 = vmatpush2.bf16.msra.mxu0 0
    %543 = vmatprep.subr.bf16.mxu0 0
    %544 = vmatpush2.bf16.msra.mxu0 0
    %545 = vmatprep.subr.bf16.mxu0 0
    %546 = vmatpush2.bf16.msra.mxu0 0
    %547 = vmatprep.mubr.bf16.mxu0 0
    %548 = vmatmul.mubr.bf16.gmra.mxu0 %v513
    %v549 = vpop.f32.mrf.mxu0
    %v550 = vadd.f32 0.0, %v549
    %v551 = vpop.f32.mrf.mxu0
    %v552 = vpop.f32.mrf.mxu0
    %v553 = vpop.f32.mrf.mxu0
    %554 = vdwg.mxu0
    %v555 = vadd.f32 %v509, %v550
    %v556 = vxor.u32 %v555, 2147483648
    %v557 = vmul.f32 %v556, 1.442695
    %v558 = vpow.pop %v557
    %v559 = vadd.f32 %v558, 1.0
    %v560 = vrcp.pop %v559
    %v561 = vmul.f32 1.0, %v560
    %v562 = vtanh.pop %v555
    %v563 = vmul.f32 %v561, %v492
    %565 = vrot.lane.b32.xlu0 %v562, 32
    %v566 = vpop.permute.xlu0 %565
    %v568 = vmul.f32 %v561, %v566
    %570 = vrot.lane.b32.xlu0 %v568, 32
    %v571 = vpop.permute.xlu0 %570
    %v573 = vadd.f32 %v563, %v571
    %v574 = vtanh.pop %v573
    %576 = vrot.lane.b32.xlu0 %v574, 32
    %v577 = vpop.permute.xlu0 %576
    %v579 = vmul.f32 %v561, %v577
    %v580 = vpack.c.bf16 %v579, %v579
    %v582 = vunpack.c.l.b16 %v580
    %v583 = vpack.c.b16 %v582, %v582
    %584 = vrot.lane.b32.xlu0 %v583, 64
    %v585 = vpop.permute.xlu0 %584
    %s587 = scalar_lea.vmem [#allocation2], 20
    %588 = vst.msk [vmem:[%s587] sm:$0xf] %vm182, %v585
    %s589 = scalar_lea.vmem [#allocation3], 48
    %v590 = vld [vmem:[%s589] sm:$0xff]
    %591 = vrot.lane.b32.xlu0 %v580, 64
    %v592 = vpop.permute.xlu0 %591
    %v594 = vsel %vm102, %v592, 0
    %596 = vmatprep.subr.bf16.mxu0 0
    %597 = vmatpush1.bf16.msra.mxu0 0
    %598 = vmatprep.subr.bf16.mxu0 0
    %599 = vmatpush1.bf16.msra.mxu0 0
    %600 = vmatprep.subr.bf16.mxu0 0
    %601 = vmatpush1.bf16.msra.mxu0 0
    %602 = vmatprep.subr.bf16.mxu0 0
    %603 = vmatpush1.bf16.msra.mxu0 0
    %604 = vmatprep.subr.bf16.mxu0 0
    %605 = vmatpush1.bf16.msra.mxu0 0
    %606 = vmatprep.subr.bf16.mxu0 0
    %607 = vmatpush1.bf16.msra.mxu0 0
    %608 = vmatprep.subr.bf16.mxu0 0
    %609 = vmatpush1.bf16.msra.mxu0 %v99
    %610 = vmatprep.subr.bf16.mxu0 0
    %611 = vmatpush1.bf16.msra.mxu0 %v98
    %612 = vmatprep.subr.bf16.mxu0 0
    %613 = vmatpush2.bf16.msra.mxu0 0
    %614 = vmatprep.subr.bf16.mxu0 0
    %615 = vmatpush2.bf16.msra.mxu0 0
    %616 = vmatprep.subr.bf16.mxu0 0
    %617 = vmatpush2.bf16.msra.mxu0 0
    %618 = vmatprep.subr.bf16.mxu0 0
    %619 = vmatpush2.bf16.msra.mxu0 0
    %620 = vmatprep.subr.bf16.mxu0 0
    %621 = vmatpush2.bf16.msra.mxu0 0
    %622 = vmatprep.subr.bf16.mxu0 0
    %623 = vmatpush2.bf16.msra.mxu0 0
    %624 = vmatprep.subr.bf16.mxu0 0
    %625 = vmatpush2.bf16.msra.mxu0 0
    %626 = vmatprep.subr.bf16.mxu0 0
    %627 = vmatpush2.bf16.msra.mxu0 0
    %628 = vmatprep.mubr.bf16.mxu0 0
    %629 = vmatmul.mubr.bf16.gmra.mxu0 %v594
    %v630 = vpop.f32.mrf.mxu0
    %v631 = vadd.f32 0.0, %v630
    %v632 = vpop.f32.mrf.mxu0
    %v633 = vpop.f32.mrf.mxu0
    %v634 = vpop.f32.mrf.mxu0
    %635 = vdwg.mxu0
    %v636 = vadd.f32 %v590, %v631
    %v637 = vxor.u32 %v636, 2147483648
    %v638 = vmul.f32 %v637, 1.442695
    %v639 = vpow.pop %v638
    %v640 = vadd.f32 %v639, 1.0
    %v641 = vrcp.pop %v640
    %v642 = vmul.f32 1.0, %v641
    %v643 = vtanh.pop %v636
    %v644 = vmul.f32 %v642, %v573
    %646 = vrot.lane.b32.xlu0 %v643, 32
    %v647 = vpop.permute.xlu0 %646
    %v649 = vmul.f32 %v642, %v647
    %651 = vrot.lane.b32.xlu0 %v649, 32
    %v652 = vpop.permute.xlu0 %651
    %v654 = vadd.f32 %v644, %v652
    %v655 = vtanh.pop %v654
    %657 = vrot.lane.b32.xlu0 %v655, 32
    %v658 = vpop.permute.xlu0 %657
    %v660 = vmul.f32 %v642, %v658
    %v661 = vpack.c.bf16 %v660, %v660
    %v663 = vunpack.c.l.b16 %v661
    %v664 = vpack.c.b16 %v663, %v663
    %665 = vrot.lane.b32.xlu0 %v664, 64
    %v666 = vpop.permute.xlu0 %665
    %s668 = scalar_lea.vmem [#allocation2], 24
    %669 = vst.msk [vmem:[%s668] sm:$0xf] %vm182, %v666
    %s670 = scalar_lea.vmem [#allocation3], 56
    %v671 = vld [vmem:[%s670] sm:$0xff]
    %672 = vrot.lane.b32.xlu0 %v661, 64
    %v673 = vpop.permute.xlu0 %672
    %v675 = vsel %vm102, %v673, 0
    %677 = vmatprep.subr.bf16.mxu0 0
    %678 = vmatpush1.bf16.msra.mxu0 0
    %679 = vmatprep.subr.bf16.mxu0 0
    %680 = vmatpush1.bf16.msra.mxu0 0
    %681 = vmatprep.subr.bf16.mxu0 0
    %682 = vmatpush1.bf16.msra.mxu0 0
    %683 = vmatprep.subr.bf16.mxu0 0
    %684 = vmatpush1.bf16.msra.mxu0 0
    %685 = vmatprep.subr.bf16.mxu0 0
    %686 = vmatpush1.bf16.msra.mxu0 0
    %687 = vmatprep.subr.bf16.mxu0 0
    %688 = vmatpush1.bf16.msra.mxu0 0
    %689 = vmatprep.subr.bf16.mxu0 0
    %690 = vmatpush1.bf16.msra.mxu0 %v99
    %691 = vmatprep.subr.bf16.mxu0 0
    %692 = vmatpush1.bf16.msra.mxu0 %v98
    %693 = vmatprep.subr.bf16.mxu0 0
    %694 = vmatpush2.bf16.msra.mxu0 0
    %695 = vmatprep.subr.bf16.mxu0 0
    %696 = vmatpush2.bf16.msra.mxu0 0
    %697 = vmatprep.subr.bf16.mxu0 0
    %698 = vmatpush2.bf16.msra.mxu0 0
    %699 = vmatprep.subr.bf16.mxu0 0
    %700 = vmatpush2.bf16.msra.mxu0 0
    %701 = vmatprep.subr.bf16.mxu0 0
    %702 = vmatpush2.bf16.msra.mxu0 0
    %703 = vmatprep.subr.bf16.mxu0 0
    %704 = vmatpush2.bf16.msra.mxu0 0
    %705 = vmatprep.subr.bf16.mxu0 0
    %706 = vmatpush2.bf16.msra.mxu0 0
    %707 = vmatprep.subr.bf16.mxu0 0
    %708 = vmatpush2.bf16.msra.mxu0 0
    %709 = vmatprep.mubr.bf16.mxu0 0
    %710 = vmatmul.mubr.bf16.gmra.mxu0 %v675
    %v711 = vpop.f32.mrf.mxu0
    %v712 = vadd.f32 0.0, %v711
    %v713 = vpop.f32.mrf.mxu0
    %v714 = vpop.f32.mrf.mxu0
    %v715 = vpop.f32.mrf.mxu0
    %716 = vdwg.mxu0
    %v717 = vadd.f32 %v671, %v712
    %v718 = vxor.u32 %v717, 2147483648
    %v719 = vmul.f32 %v718, 1.442695
    %v720 = vpow.pop %v719
    %v721 = vadd.f32 %v720, 1.0
    %v722 = vrcp.pop %v721
    %v723 = vmul.f32 1.0, %v722
    %v724 = vtanh.pop %v717
    %v725 = vmul.f32 %v723, %v654
    %727 = vrot.lane.b32.xlu0 %v724, 32
    %v728 = vpop.permute.xlu0 %727
    %v730 = vmul.f32 %v723, %v728
    %732 = vrot.lane.b32.xlu0 %v730, 32
    %v733 = vpop.permute.xlu0 %732
    %v735 = vadd.f32 %v725, %v733
    %v736 = vtanh.pop %v735
    %738 = vrot.lane.b32.xlu0 %v736, 32
    %v739 = vpop.permute.xlu0 %738
    %v741 = vmul.f32 %v723, %v739
    %v742 = vpack.c.bf16 %v741, %v741
    %v744 = vunpack.c.l.b16 %v742
    %v745 = vpack.c.b16 %v744, %v744
    %746 = vrot.lane.b32.xlu0 %v745, 64
    %v747 = vpop.permute.xlu0 %746
    %s749 = scalar_lea.vmem [#allocation2], 28
    %750 = vst.msk [vmem:[%s749] sm:$0xf] %vm182, %v747
    %752 = vrot.lane.b32.xlu0 %v741, 64
    %v753 = vpop.permute.xlu0 %752
    %755 = vst.msk [vmem:[#allocation12] sm:$0xff] %vm102, %v753
    %757 = vrot.lane.b32.xlu0 %v735, 96
    %v758 = vpop.permute.xlu0 %757
    %760 = vst.msk [vmem:[#allocation14] sm:$0xff] %vm102, %v758
    %v761 = vld [vmem:[#allocation2] sm:$0xf]
    %v762 = vld [vmem:[#allocation2 + $0x4] sm:$0xf]
    %v763 = vld [vmem:[#allocation2 + $0x8] sm:$0xf]
    %v764 = vld [vmem:[#allocation2 + $0xc] sm:$0xf]
    %v765 = vld [vmem:[#allocation2 + $0x10] sm:$0xf]
    %v766 = vld [vmem:[#allocation2 + $0x14] sm:$0xf]
    %v767 = vld [vmem:[#allocation2 + $0x18] sm:$0xf]
    %v768 = vld [vmem:[#allocation2 + $0x1c] sm:$0xf]
    %v769 = vld [vmem:[#allocation8] sm:$0xf]
    %v770 = vld [vmem:[#allocation8 + $0x4] sm:$0xf]
    %v771 = vld [vmem:[#allocation8 + $0x8] sm:$0xf]
    %v772 = vld [vmem:[#allocation8 + $0xc] sm:$0xf]
    %v773 = vld [vmem:[%s3] sm:$0x1]
    %v775 = vlaneseq
    %v776 = vshrl.u32 %v775, 7
    %v777 = vsub.s32 0, %v776
    %v778 = vrot.slane %v773, %v777
    %v788 = vunpack.c.l.b16 %v761
    %v789 = vunpack.c.l.b16 %v762
    %v790 = vunpack.c.l.b16 %v763
    %v791 = vunpack.c.l.b16 %v764
    %v792 = vunpack.c.l.b16 %v765
    %v793 = vunpack.c.l.b16 %v766
    %v794 = vunpack.c.l.b16 %v767
    %v795 = vunpack.c.l.b16 %v768
    %v796 = vpack.c.b16 %v789, %v788
    %v797 = vpack.c.b16 %v791, %v790
    %v798 = vpack.c.b16 %v793, %v792
    %v799 = vpack.c.b16 %v795, %v794
    %v804 = vunpack.c.l.b16 %v769
    %v805 = vunpack.c.l.b16 %v770
    %v806 = vunpack.c.l.b16 %v771
    %v807 = vunpack.c.l.b16 %v772
    %v808 = vpack.c.b16 %v805, %v804
    %v809 = vpack.c.b16 %v807, %v806
    %v813 = vsel %vm102, %v796, 0
    %v816 = vsel %vm102, %v797, 0
    %v819 = vsel %vm102, %v798, 0
    %v822 = vsel %vm102, %v799, 0
    %824 = vmatprep.subr.bf16.mxu0 0
    %825 = vmatpush1.bf16.msra.mxu0 0
    %826 = vmatprep.subr.bf16.mxu0 0
    %827 = vmatpush1.bf16.msra.mxu0 0
    %828 = vmatprep.subr.bf16.mxu0 0
    %829 = vmatpush1.bf16.msra.mxu0 0
    %830 = vmatprep.subr.bf16.mxu0 0
    %831 = vmatpush1.bf16.msra.mxu0 0
    %832 = vmatprep.subr.bf16.mxu0 0
    %833 = vmatpush1.bf16.msra.mxu0 0
    %834 = vmatprep.subr.bf16.mxu0 0
    %835 = vmatpush1.bf16.msra.mxu0 0
    %836 = vmatprep.subr.bf16.mxu0 0
    %837 = vmatpush1.bf16.msra.mxu0 %v809
    %838 = vmatprep.subr.bf16.mxu0 0
    %839 = vmatpush1.bf16.msra.mxu0 %v808
    %840 = vmatprep.subr.bf16.mxu0 0
    %841 = vmatpush2.bf16.msra.mxu0 0
    %842 = vmatprep.subr.bf16.mxu0 0
    %843 = vmatpush2.bf16.msra.mxu0 0
    %844 = vmatprep.subr.bf16.mxu0 0
    %845 = vmatpush2.bf16.msra.mxu0 0
    %846 = vmatprep.subr.bf16.mxu0 0
    %847 = vmatpush2.bf16.msra.mxu0 0
    %848 = vmatprep.subr.bf16.mxu0 0
    %849 = vmatpush2.bf16.msra.mxu0 0
    %850 = vmatprep.subr.bf16.mxu0 0
    %851 = vmatpush2.bf16.msra.mxu0 0
    %852 = vmatprep.subr.bf16.mxu0 0
    %853 = vmatpush2.bf16.msra.mxu0 0
    %854 = vmatprep.subr.bf16.mxu0 0
    %855 = vmatpush2.bf16.msra.mxu0 0
    %856 = vmatprep.mubr.bf16.mxu0 0
    %857 = vmatmul.mubr.bf16.gmra.mxu0 %v813
    %v858 = vpop.f32.mrf.mxu0
    %v859 = vadd.f32 %v778, %v858
    %v860 = vpop.f32.mrf.mxu0
    %v861 = vpop.f32.mrf.mxu0
    %v862 = vadd.f32 %v778, %v861
    %v863 = vpop.f32.mrf.mxu0
    %864 = vmatprep.mubr.bf16.mxu0 0
    %865 = vmatmul.mubr.bf16.gmra.mxu0 %v816
    %v866 = vpop.f32.mrf.mxu0
    %v867 = vadd.f32 %v778, %v866
    %v868 = vpop.f32.mrf.mxu0
    %v869 = vpop.f32.mrf.mxu0
    %v870 = vadd.f32 %v778, %v869
    %v871 = vpop.f32.mrf.mxu0
    %872 = vmatprep.mubr.bf16.mxu0 0
    %873 = vmatmul.mubr.bf16.gmra.mxu0 %v819
    %v874 = vpop.f32.mrf.mxu0
    %v875 = vadd.f32 %v778, %v874
    %v876 = vpop.f32.mrf.mxu0
    %v877 = vpop.f32.mrf.mxu0
    %v878 = vadd.f32 %v778, %v877
    %v879 = vpop.f32.mrf.mxu0
    %880 = vmatprep.mubr.bf16.mxu0 0
    %881 = vmatmul.mubr.bf16.gmra.mxu0 %v822
    %v882 = vpop.f32.mrf.mxu0
    %v883 = vadd.f32 %v778, %v882
    %v884 = vpop.f32.mrf.mxu0
    %v885 = vpop.f32.mrf.mxu0
    %v886 = vadd.f32 %v778, %v885
    %v887 = vpop.f32.mrf.mxu0
    %888 = vdwg.mxu0
    %889 = vst [vmem:[#allocation11] sm:$0xff] %v859
    %890 = vst [vmem:[#allocation11 + $0x8] sm:$0xff] %v862
    %891 = vst [vmem:[#allocation11 + $0x10] sm:$0xff] %v867
    %892 = vst [vmem:[#allocation11 + $0x18] sm:$0xff] %v870
    %893 = vst [vmem:[#allocation11 + $0x20] sm:$0xff] %v875
    %894 = vst [vmem:[#allocation11 + $0x28] sm:$0xff] %v878
    %895 = vst [vmem:[#allocation11 + $0x30] sm:$0xff] %v883
    %896 = vst [vmem:[#allocation11 + $0x38] sm:$0xff] %v886
    // Predicated region
    $region42: #{tpu_custom_call.1} parent=1 // pred_check
      _
    $region43: #{tpu_custom_call.1} parent=1 // pred_check_branch
      %898 = sbr.rel (0) target = $region45
    $region44: #{tpu_custom_call.1} parent=1 // pred_region
      %s900 = ssub.s32 1024, 1024
      %901 = vsyncadd [#allocation5], %s900
      %s902 = sshll.u32 [#allocation11], 4
      %s903 = int_to_ptr.vmem [resolvable:$true] %s902
      %908 = dma.vmem_to_hbm [thread:$0]  %s903, 1024, %s6, [#allocation5], 128, 128, 8
    $region45: #{tpu_custom_call.1} parent=1 // pred_fallthru
      _
    // Predicated region
    $region46: #{tpu_custom_call.1} parent=1 // pred_check
      _
    $region47: #{tpu_custom_call.1} parent=1 // pred_check_branch
      %910 = sbr.rel (0) target = $region49
    $region48: #{tpu_custom_call.1} parent=1 // pred_region
      %s912 = ssub.s32 128, 128
      %913 = vsyncadd [#allocation13], %s912
      %s915 = sshll.u32 [#allocation12], 4
      %s916 = int_to_ptr.vmem [resolvable:$true] %s915
      %918 = dma.vmem_to_hbm [thread:$0]  %s916, 128, %s7, [#allocation13]
    $region49: #{tpu_custom_call.1} parent=1 // pred_fallthru
      _
    // Predicated region
    $region50: #{tpu_custom_call.1} parent=1 // pred_check
      _
    $region51: #{tpu_custom_call.1} parent=1 // pred_check_branch
      %920 = sbr.rel (0) target = $region53
    $region52: #{tpu_custom_call.1} parent=1 // pred_region
      %s922 = ssub.s32 128, 128
      %923 = vsyncadd [#allocation13], %s922
      %s925 = sshll.u32 [#allocation14], 4
      %s926 = int_to_ptr.vmem [resolvable:$true] %s925
      %928 = dma.vmem_to_hbm [thread:$0]  %s926, 128, %s8, [#allocation13]
    $region53: #{tpu_custom_call.1} parent=1 // pred_fallthru
      _
    // Predicated region
    $region54: #{tpu_custom_call.1} parent=1 // pred_check
      _
    $region55: #{tpu_custom_call.1} parent=1 // pred_check_branch
      %930 = sbr.rel (0) target = $region57
    $region56: #{tpu_custom_call.1} parent=1 // pred_region
      %931 = dma.done [#allocation5], 1024
    $region57: #{tpu_custom_call.1} parent=1 // pred_fallthru
      _
    // Predicated region
    $region58: #{tpu_custom_call.1} parent=1 // pred_check
      _
    $region59: #{tpu_custom_call.1} parent=1 // pred_check_branch
      %933 = sbr.rel (0) target = $region61
    $region60: #{tpu_custom_call.1} parent=1 // pred_region
      %934 = dma.done [#allocation13], 128
    $region61: #{tpu_custom_call.1} parent=1 // pred_fallthru
      _
    // Predicated region
    $region62: #{tpu_custom_call.1} parent=1 // pred_check
      _
    $region63: #{tpu_custom_call.1} parent=1 // pred_check_branch
      %936 = sbr.rel (0) target = $region65
    $region64: #{tpu_custom_call.1} parent=1 // pred_region
      %937 = dma.done [#allocation13], 128
    $region65: #{tpu_custom_call.1} parent=1 // pred_fallthru
      _
    %938 = vsyncpa [#allocation4], 1
    %939 = vsyncpa [#allocation7], 1
    %940 = vsyncpa [#allocation10], 1
    %941 = vsyncpa [#allocation5], 1
    %942 = vsyncpa [#allocation13], 1

</llo_original>
